<compile_context>
chip_gen: v6e
topology: v6e:2x2x1
jax: 0.10.0
libtpu: 0.0.40
codegen_flags: <defaults>
</compile_context>

<pallas_src>
import jax
import jax.numpy as jnp
import numpy as np
from jax.experimental import pallas as pl
from jax.experimental.pallas import tpu as pltpu


def _spatial_conv_flow_kernel(z_ref, scale_ref, o_ref):
    z = z_ref[...]
    # exp in f32 on the EUP (scale row is VMEM-resident), cast once to z's
    # dtype so the broadcast multiply runs dtype-native (bf16 on v6e/v7x).
    s = jnp.exp(scale_ref[...].astype(jnp.float32)).astype(z.dtype)
    o_ref[...] = (z * s).astype(o_ref.dtype)


def spatial_conv_flow(z, scale_params):
    """out[n, c, h, w] = z[n, c, h, w] * exp(scale_params[0, 0, h, w])."""
    N, C, H, W = z.shape
    HW = H * W
    rows = N * C

    # Lane-dense 2D views: spatial dims fused onto the lane axis.
    z2d = z.reshape(rows, HW)
    s2d = scale_params.reshape(1, HW)

    itemsize = jnp.dtype(z.dtype).itemsize
    # Sublane multiple for the row tile: 8 (f32), 16 (bf16), 32 (int8).
    sub = max(8, 32 // itemsize)
    rows_pad = ((rows + sub - 1) // sub) * sub

    # Tile budget: 8 MiB tiles; double-buffered in + out tiles ~= 32 MiB,
    # which fits v7x's 64 MiB-per-TC VMEM.  Raise the scoped limit explicitly.
    MAX_TILE_BYTES = 8 * 1024 * 1024
    VMEM_LIMIT_BYTES = 48 * 1024 * 1024

    # Column tile: prefer the full row (TC = HW) -> contiguous DMAs, 1-D grid,
    # scale row resident for the whole call.
    full_row_bytes = sub * HW * itemsize
    if full_row_bytes <= MAX_TILE_BYTES:
        TC = HW
    elif HW % 128 == 0:
        TC = min(HW, max(128, (MAX_TILE_BYTES // (sub * itemsize)) // 128 * 128))
    else:
        # TODO(synk): HW not a multiple of 128 -> masked partial stores; keep
        # spatial sizes lane-padded at the model level for the fast path.
        TC = HW

    # Row tile: as many sublane-multiples as fit the byte budget.
    tr_cap = max(sub, (MAX_TILE_BYTES // (TC * itemsize)) // sub * sub)
    TR = min(tr_cap, rows_pad)

    n_row_tiles = pl.cdiv(rows, TR)
    n_col_tiles = pl.cdiv(HW, TC)

    # v7x megacore: guarantee >= 2 parallel grid steps when the data allows it,
    # so both TensorCores (and their DMA engines) stream HBM.
    if n_row_tiles < 2 and n_col_tiles < 2 and rows_pad >= 2 * sub:
        TR = max(sub, ((pl.cdiv(rows, 2) + sub - 1) // sub) * sub)
        n_row_tiles = pl.cdiv(rows, TR)

    if n_col_tiles == 1:
        # 1-D grid over row tiles; scale block index is constant -> DMA'd once.
        grid = (n_row_tiles,)
        in_specs = [
            pl.BlockSpec((TR, TC), lambda i: (i, 0)),
            pl.BlockSpec((1, TC), lambda i: (0, 0)),
        ]
        out_specs = pl.BlockSpec((TR, TC), lambda i: (i, 0))
        dims = ("parallel",)
    else:
        # Column axis OUTERMOST: the scale block index (0, j) only changes on
        # the outer axis -> one scale fetch per column tile, not per step.
        grid = (n_col_tiles, n_row_tiles)
        in_specs = [
            pl.BlockSpec((TR, TC), lambda j, i: (i, j)),
            pl.BlockSpec((1, TC), lambda j, i: (0, j)),
        ]
        out_specs = pl.BlockSpec((TR, TC), lambda j, i: (i, j))
        dims = ("parallel", "parallel")

    cost = pl.CostEstimate(
        flops=rows * HW,                       # one multiply per element
        transcendentals=HW,                    # exp over the scale row
        bytes_accessed=2 * rows * HW * itemsize
        + HW * jnp.dtype(scale_params.dtype).itemsize,
    )

    out2d = pl.pallas_call(
        _spatial_conv_flow_kernel,
        out_shape=jax.ShapeDtypeStruct((rows, HW), z.dtype),
        grid=grid,
        in_specs=in_specs,
        out_specs=out_specs,
        compiler_params=pltpu.CompilerParams(
            dimension_semantics=dims,
            vmem_limit_bytes=VMEM_LIMIT_BYTES,
        ),
        cost_estimate=cost,
    )(z2d, s2d)

    return out2d.reshape(N, C, H, W)


if __name__ == "__main__":
    # Shapes implied by the module: z is (in, out, H, W); use (2, 4, 16, 16).
    N, C, H, W = 2, 4, 16, 16

    key = jax.random.PRNGKey(0)
    k_z, k_s = jax.random.split(key)

    z = jax.random.normal(k_z, (N, C, H, W), dtype=jnp.float32)
    # nn.init.normal_(self.scale_params, 1.0, 0.02)
    scale_params = 1.0 + 0.02 * jax.random.normal(
        k_s, (1, 1, H, W), dtype=jnp.float32)

    y = spatial_conv_flow(z, scale_params)
    y = jax.block_until_ready(y)

    # Pure-JAX reference matching the PyTorch einsum exactly.
    ref = jnp.einsum("iohw,cchw->iohw", z, jnp.exp(scale_params))
    np.testing.assert_allclose(np.asarray(y), np.asarray(ref),
                               rtol=1e-5, atol=1e-5)
    assert y.shape == (N, C, H, W)
    print("KERNEL_OK")
</pallas_src>

<mosaic_0001>
module attributes {stable_mosaic.version = 11 : i64} {
  func.func @_spatial_conv_flow_kernel(%arg0: i32, %arg1: memref<8x256xf32, #tpu.memory_space<vmem>>, %arg2: memref<1x256xf32, #tpu.memory_space<vmem>>, %arg3: memref<8x256xf32, #tpu.memory_space<vmem>>) attributes {dimension_semantics = [#tpu.dimension_semantics<parallel>], iteration_bounds = array<i64: 1>, scalar_prefetch = 0 : i64, scratch_operands = 0 : i64, tpu.core_type = #tpu.core_type<tc>, window_params = [{transform_indices = @transform_0, window_bounds = array<i64: 8, 256>}, {pipeline_mode = #tpu.pipeline_mode<synchronous>, transform_indices = @transform_1, window_bounds = array<i64: 1, 256>}, {transform_indices = @transform_2, window_bounds = array<i64: 8, 256>}]} {
    %c0 = arith.constant 0 : index
    %c0_0 = arith.constant 0 : index
    %0 = vector.load %arg1[%c0, %c0_0] : memref<8x256xf32, #tpu.memory_space<vmem>>, vector<8x256xf32>
    %c0_1 = arith.constant 0 : index
    %c0_2 = arith.constant 0 : index
    %1 = vector.load %arg2[%c0_1, %c0_2] : memref<1x256xf32, #tpu.memory_space<vmem>>, vector<1x256xf32>
    %2 = math.exp %1 : vector<1x256xf32>
    %3 = vector.broadcast %2 : vector<1x256xf32> to vector<8x256xf32>
    %4 = arith.mulf %0, %3 : vector<8x256xf32>
    %c0_3 = arith.constant 0 : index
    %c0_4 = arith.constant 0 : index
    %5 = vector.load %arg3[%c0_3, %c0_4] : memref<8x256xf32, #tpu.memory_space<vmem>>, vector<8x256xf32>
    tpu.vector_store %arg3[%c0_3, %c0_4], %4 {strides = array<i32>} : memref<8x256xf32, #tpu.memory_space<vmem>>, vector<8x256xf32>,
    return
  }
  func.func @transform_0(%arg0: i32) -> (i32, i32) {
    %c0_i32 = arith.constant 0 : i32
    %c0_i32_0 = arith.constant 0 : i32
    return %arg0, %c0_i32 : i32, i32
  }
  func.func @transform_1(%arg0: i32) -> (i32, i32) {
    %c0_i32 = arith.constant 0 : i32
    %c0_i32_0 = arith.constant 0 : i32
    %c0_i32_1 = arith.constant 0 : i32
    return %c0_i32, %c0_i32_0 : i32, i32
  }
  func.func @transform_2(%arg0: i32) -> (i32, i32) {
    %c0_i32 = arith.constant 0 : i32
    %c0_i32_0 = arith.constant 0 : i32
    return %arg0, %c0_i32 : i32, i32
  }
}

</mosaic_0001>

<llo_original>
// kernel: tpu_custom_call.1
$region0: #{tpu_custom_call.1}
  #allocation0 [shape = 'u32[]', space=smem, size = 0x4, offset = 0x4, fixed_abs, tag = 'smem constant byte address 0x4 - core index']
  #allocation1 [shape = 'u32[144,128]{1,0:T(1,128)}', space=vmem, size = 0x12000, scoped, tag = 'internal scratch']
  %s0 = inlined_call_operand.hbm [shape: f32[8,256], index: 0, kind: input, shape index: {}]
  %s1 = inlined_call_operand.hbm [shape: f32[1,256], index: 1, kind: input, shape index: {}]
  %s2 = inlined_call_operand.hbm [shape: f32[8,256], index: 2, kind: output, shape index: {}]
  %s3 = sld [smem:[#allocation0]]
  $region26: #{tpu_custom_call.1} parent=0
    _
  %s5 = ssub.s32 1, %s3
  %s6 = scalar_select 0, %s5, %s3
  $region1: #{tpu_custom_call.1} parent=0
    #allocation2 [shape = 'u8[8192]{0}', space=vmem, size = 0x2000, scoped, tag = 'input window, operand 0, single buffered']
    #allocation3 [shape = 's32[1]{0}', space=sflag, size = 0x4, scoped, tag = 'scoped memory for tpu_custom_call.1']
    #allocation4 [shape = 's32[1]{0}', space=sflag, size = 0x4, scoped, tag = 'scoped memory for tpu_custom_call.1']
    #allocation5 [shape = 'u8[1024]{0}', space=vmem, size = 0x400, scoped, tag = 'input window, operand 1, single buffered']
    #allocation6 [shape = 's32[1]{0}', space=sflag, size = 0x4, scoped, tag = 'scoped memory for tpu_custom_call.1']
    #allocation7 [shape = 'u8[8192]{0}', space=vmem, size = 0x2000, scoped, tag = 'output window, operand 0, single buffered']
    %7 = vsyncpa [#allocation3], 0
    %8 = vsyncpa [#allocation6], 0
    %9 = vsyncpa [#allocation4], 0
    // Predicated region
    $region2: #{tpu_custom_call.1} parent=1 // pred_check
      _
    $region3: #{tpu_custom_call.1} parent=1 // pred_check_branch
      %11 = sbr.rel (0) target = $region5
    $region4: #{tpu_custom_call.1} parent=1 // pred_region
      %s13 = ssub.s32 256, 256
      %14 = vsyncadd [#allocation3], %s13
      %s16 = sshll.u32 [#allocation2], 4
      %s17 = int_to_ptr.vmem [resolvable:$true] %s16
      %19 = dma.hbm_to_vmem [thread:$0]  %s0, 256, %s17, [#allocation3]
    $region5: #{tpu_custom_call.1} parent=1 // pred_fallthru
      _
    // Predicated region
    $region6: #{tpu_custom_call.1} parent=1 // pred_check
      _
    $region7: #{tpu_custom_call.1} parent=1 // pred_check_branch
      %21 = sbr.rel (0) target = $region9
    $region8: #{tpu_custom_call.1} parent=1 // pred_region
      %s23 = ssub.s32 32, 32
      %24 = vsyncadd [#allocation6], %s23
      %s26 = sshll.u32 [#allocation5], 4
      %s27 = int_to_ptr.vmem [resolvable:$true] %s26
      %29 = dma.hbm_to_vmem [thread:$0]  %s1, 32, %s27, [#allocation6]
    $region9: #{tpu_custom_call.1} parent=1 // pred_fallthru
      _
    // Predicated region
    $region10: #{tpu_custom_call.1} parent=1 // pred_check
      _
    $region11: #{tpu_custom_call.1} parent=1 // pred_check_branch
      %31 = sbr.rel (0) target = $region13
    $region12: #{tpu_custom_call.1} parent=1 // pred_region
      %32 = dma.done [#allocation3], 256
    $region13: #{tpu_custom_call.1} parent=1 // pred_fallthru
      _
    // Predicated region
    $region14: #{tpu_custom_call.1} parent=1 // pred_check
      _
    $region15: #{tpu_custom_call.1} parent=1 // pred_check_branch
      %34 = sbr.rel (0) target = $region17
    $region16: #{tpu_custom_call.1} parent=1 // pred_region
      %35 = dma.done [#allocation6], 32
    $region17: #{tpu_custom_call.1} parent=1 // pred_fallthru
      _
    %v36 = vld [vmem:[#allocation2] sm:$0xff]
    %v37 = vld [vmem:[#allocation2 + $0x8] sm:$0xff]
    %v38 = vld [vmem:[#allocation5] sm:$0x3]
    %v39 = vmul.f32 %v38, 1.442695
    %v40 = vpow.pop %v39
    %v42 = vlaneseq
    %v43 = vshrl.u32 %v42, 7
    %v44 = vsub.s32 0, %v43
    %v45 = vrot.slane %v40, %v44
    %v46 = vlaneseq
    %v47 = vshrl.u32 %v46, 7
    %v48 = vsub.s32 1, %v47
    %v49 = vrot.slane %v40, %v48
    %v52 = vmul.f32 %v36, %v45
    %v53 = vmul.f32 %v37, %v49
    %54 = vst [vmem:[#allocation7] sm:$0xff] %v52
    %55 = vst [vmem:[#allocation7 + $0x8] sm:$0xff] %v53
    // Predicated region
    $region18: #{tpu_custom_call.1} parent=1 // pred_check
      _
    $region19: #{tpu_custom_call.1} parent=1 // pred_check_branch
      %57 = sbr.rel (0) target = $region21
    $region20: #{tpu_custom_call.1} parent=1 // pred_region
      %s59 = ssub.s32 256, 256
      %60 = vsyncadd [#allocation4], %s59
      %s62 = sshll.u32 [#allocation7], 4
      %s63 = int_to_ptr.vmem [resolvable:$true] %s62
      %65 = dma.vmem_to_hbm [thread:$0]  %s63, 256, %s2, [#allocation4]
    $region21: #{tpu_custom_call.1} parent=1 // pred_fallthru
      _
    // Predicated region
    $region22: #{tpu_custom_call.1} parent=1 // pred_check
      _
    $region23: #{tpu_custom_call.1} parent=1 // pred_check_branch
      %67 = sbr.rel (0) target = $region25
    $region24: #{tpu_custom_call.1} parent=1 // pred_region
      %68 = dma.done [#allocation4], 256
    $region25: #{tpu_custom_call.1} parent=1 // pred_fallthru
      _
    %69 = vsyncpa [#allocation3], 1
    %70 = vsyncpa [#allocation6], 1
    %71 = vsyncpa [#allocation4], 1

</llo_original>
